<compile_context>
chip_gen: v5e
topology: v5e:2x2
jax: 0.10.0
libtpu: 0.0.40
codegen_flags: <defaults>
</compile_context>

<pallas_src>
import functools

import jax
import jax.numpy as jnp
from jax import lax
from jax.experimental import pallas as pl
from jax.experimental.pallas import tpu as pltpu


def _round_up(x, m):
    return ((x + m - 1) // m) * m


def _sublane_pack(dtype):
    # rows per packed sublane group: f32 -> 8, bf16/f16 -> 16, int8/fp8 -> 32
    return max(8, 32 // jnp.dtype(dtype).itemsize)


def _vmem_capacity_bytes():
    try:
        info = pltpu.get_tpu_info()
        cap = getattr(info, "vmem_capacity_bytes", None)
        if cap:
            return int(cap)
    except Exception:
        pass
    return 64 * 1024 * 1024  # conservative fallback (v7x-sized)


def _sae_kernel(z_ref, w_ref, b_enc_ref, b_dec_ref, h_ref, zhat_ref, *scratch):
    """One (batch-tile, hidden-tile) grid step of the SparseAE forward.

    z_ref:     (TB, D)   input latents (batch tile)
    w_ref:     (TH, D)   encoder weight tile (nn.Linear layout)
    b_enc_ref: (1, TH)   encoder bias tile
    b_dec_ref: (1, D)    decoder bias
    h_ref:     (TB, TH)  hidden activations (output tile)
    zhat_ref:  (TB, D)   reconstruction (output, resident across the H axis)
    scratch:   optional (TB, D) f32 VMEM accumulator (only for non-f32 output)
    """
    use_acc = len(scratch) > 0
    j = pl.program_id(1)

    z = z_ref[...]
    w_t = w_ref[...]

    # Encoder: contract z (.., D) with W (.., D) on D — no materialized W.T.
    pre = lax.dot_general(
        z,
        w_t,
        dimension_numbers=(((1,), (1,)), ((), ())),
        preferred_element_type=jnp.float32,
    )
    h = jnp.maximum(pre + b_enc_ref[...].astype(jnp.float32), 0.0)
    h_ref[...] = h.astype(h_ref.dtype)

    # Tied-weight decoder partial: h_tile @ W_tile, accumulated over H tiles.
    partial = jnp.dot(h.astype(w_t.dtype), w_t, preferred_element_type=jnp.float32)

    if use_acc:
        acc_ref = scratch[0]

        @pl.when(j == 0)
        def _init():
            acc_ref[...] = jnp.zeros_like(acc_ref)

        acc_ref[...] += partial

        @pl.when(j == pl.num_programs(1) - 1)
        def _finish():
            zhat_ref[...] = (
                acc_ref[...] + b_dec_ref[...].astype(jnp.float32)
            ).astype(zhat_ref.dtype)
    else:
        # f32 output: accumulate directly into the resident output block.
        @pl.when(j == 0)
        def _first():
            zhat_ref[...] = partial + b_dec_ref[...].astype(jnp.float32)

        @pl.when(j != 0)
        def _rest():
            zhat_ref[...] = zhat_ref[...] + partial


def sparse_ae_forward(
    z,
    w,
    b_enc,
    b_dec,
    *,
    tile_b=None,
    tile_h=None,
    vmem_limit_bytes=None,
):
    """Fused Pallas forward. Returns (h, z_hat) exactly like SparseAE.forward
    with steer=False and set_bias=True."""
    B, D = z.shape
    H, D2 = w.shape
    assert D == D2, "weight / input dim mismatch"

    z_is = jnp.dtype(z.dtype).itemsize
    w_is = jnp.dtype(w.dtype).itemsize
    use_acc = z.dtype != jnp.float32  # f32 output accumulates in-place in zhat

    # ---- generation-aware VMEM budget -------------------------------------
    vmem_cap = _vmem_capacity_bytes()
    small_vmem = vmem_cap <= 80 * 1024 * 1024  # v7x-like: 64 MiB per TC
    if vmem_limit_bytes is None:
        if small_vmem:
            vmem_limit_bytes = min(56 * 1024 * 1024, vmem_cap * 7 // 8)
        else:
            vmem_limit_bytes = min(100 * 1024 * 1024, vmem_cap * 3 // 4)
    vmem_budget = int(vmem_limit_bytes * 0.85)  # headroom for compiler scratch

    # ---- batch tile --------------------------------------------------------
    pack = _sublane_pack(z.dtype)
    Br = _round_up(B, pack)
    Hr = _round_up(H, 128)

    if tile_b is None:
        if small_vmem:
            tile_b = min(Br, 256)
            # 2 TensorCores per chip: keep >= 2 batch tiles when batch allows,
            # so the "parallel" grid axis actually shards across cores.
            if Br >= 2 * pack and -(-Br // tile_b) < 2:
                tile_b = min(tile_b, _round_up(-(-Br // 2), pack))
        else:
            tile_b = min(Br, 512 if Br >= 512 else 256)
    tile_b = max(pack, min(_round_up(tile_b, pack), Br))

    def _est(tb, th):
        # double-buffered pipelined tiles + resident f32 acc (if any)
        b = 2 * tb * D * z_is            # z in
        b += 2 * th * D * w_is           # W tile
        b += 2 * th * w_is + 2 * D * w_is  # biases
        b += 2 * tb * th * z_is          # h out
        b += 2 * tb * D * z_is           # zhat out
        if use_acc:
            b += tb * D * 4
        return b

    # shrink the batch tile if even the smallest H tile does not fit
    while tile_b > pack and _est(tile_b, 128) > vmem_budget:
        tile_b = max(pack, _round_up(tile_b // 2, pack))

    # ---- hidden tile (budget-driven, prefer an exact divisor of H) --------
    if tile_h is None:
        fixed = _est(tile_b, 0)
        per_h = 2 * D * w_is + 2 * tile_b * z_is + 2 * w_is
        avail = vmem_budget - fixed
        if avail <= 0:
            th_max = 128
        else:
            th_max = max(128, min((avail // per_h) // 128 * 128, Hr))
        # largest 128-multiple <= th_max dividing H -> no padded weight rows
        tile_h_sel = None
        cand = th_max
        while cand >= 128:
            if H % cand == 0:
                tile_h_sel = cand
                break
            cand -= 128
        tile_h = tile_h_sel if tile_h_sel is not None else th_max
    tile_h = max(128, min(_round_up(tile_h, 128), Hr))

    Bp = _round_up(B, tile_b)
    Hp = _round_up(H, tile_h)

    # TODO(synk): when H is not tile-aligned this pad is an O(H*D) copy per
    # call; for production, pre-pad the weight once outside the hot path.
    z2 = jnp.pad(z, ((0, Bp - B), (0, 0))) if Bp != B else z
    w2 = jnp.pad(w, ((0, Hp - H), (0, 0))) if Hp != H else w
    b_enc2 = (jnp.pad(b_enc, (0, Hp - H)) if Hp != H else b_enc).reshape(1, Hp)
    b_dec2 = b_dec.reshape(1, D)

    n_b = Bp // tile_b
    n_h = Hp // tile_h

    cost = pl.CostEstimate(
        flops=4 * Bp * D * Hp,  # encoder + decoder matmuls
        transcendentals=0,
        bytes_accessed=(
            Bp * D * z_is                    # z read
            + n_b * Hp * D * w_is            # W streamed once per batch tile
            + Bp * Hp * z_is                 # h written
            + Bp * D * z_is                  # z_hat written
            + (Hp + D) * w_is                # biases
        ),
    )

    scratch_shapes = (
        [pltpu.VMEM((tile_b, D), jnp.float32)] if use_acc else []
    )

    h_full, zhat_full = pl.pallas_call(
        _sae_kernel,
        out_shape=(
            jax.ShapeDtypeStruct((Bp, Hp), z.dtype),
            jax.ShapeDtypeStruct((Bp, D), z.dtype),
        ),
        grid_spec=pltpu.PrefetchScalarGridSpec(
            num_scalar_prefetch=0,
            grid=(n_b, n_h),  # reduction (H) axis last
            in_specs=[
                pl.BlockSpec((tile_b, D), lambda i, j: (i, 0)),   # z batch tile
                pl.BlockSpec((tile_h, D), lambda i, j: (j, 0)),   # weight H tile
                pl.BlockSpec((1, tile_h), lambda i, j: (0, j)),   # enc bias tile
                pl.BlockSpec((1, D), lambda i, j: (0, 0)),        # dec bias
            ],
            out_specs=[
                pl.BlockSpec((tile_b, tile_h), lambda i, j: (i, j)),  # h
                pl.BlockSpec((tile_b, D), lambda i, j: (i, 0)),       # z_hat (resident over j)
            ],
            scratch_shapes=scratch_shapes,
        ),
        compiler_params=pltpu.CompilerParams(
            dimension_semantics=("parallel", "arbitrary"),
            vmem_limit_bytes=int(vmem_limit_bytes),
        ),
        cost_estimate=cost,
    )(z2, w2, b_enc2, b_dec2)

    h = h_full[:B, :H] if (Bp != B or Hp != H) else h_full
    z_hat = zhat_full[:B, :] if Bp != B else zhat_full
    return h, z_hat


def sparse_ae_loss(z, h, z_hat, beta_l1, beta_norm):
    """Plain-JAX port of SparseAE.loss (cheap scalar reductions; not the hot path)."""
    recon_loss = jnp.mean((z_hat - z) ** 2)
    sparse_loss = beta_l1 * jnp.mean(jnp.abs(h))
    if beta_norm > 0:
        norm_z = jnp.mean(jnp.linalg.norm(z, axis=1))
        norm_z_hat = jnp.mean(jnp.linalg.norm(z_hat, axis=1))
        norm_loss = beta_norm * jnp.abs(norm_z - norm_z_hat)
    else:
        norm_loss = jnp.asarray(0.0, dtype=z.dtype)
    total = recon_loss + sparse_loss + norm_loss
    return total, recon_loss, sparse_loss, norm_loss


# TODO(synk): the `steer=True` branch (in-place thresholding h[h<1.5]=0 with
# python-side prints of active counts) is a debugging path; only the default
# steer=False forward is implemented in the kernel.


def _make_params(key, input_dim, hidden_dim):
    """Deterministic init matching __init__: xavier_uniform_ enc.weight, zero biases."""
    bound = (6.0 / (input_dim + hidden_dim)) ** 0.5
    w = jax.random.uniform(
        key, (hidden_dim, input_dim), dtype=jnp.float32, minval=-bound, maxval=bound
    )
    b_enc = jnp.zeros((hidden_dim,), jnp.float32)
    b_dec = jnp.zeros((input_dim,), jnp.float32)
    return w, b_enc, b_dec


def _check_case(key, B, input_dim, hidden_dim):
    k_z, k_w = jax.random.split(key)
    w, b_enc, b_dec = _make_params(k_w, input_dim, hidden_dim)
    z = jax.random.normal(k_z, (B, input_dim), dtype=jnp.float32)

    fwd = jax.jit(functools.partial(sparse_ae_forward))
    h, z_hat = fwd(z, w, b_enc, b_dec)
    jax.block_until_ready((h, z_hat))

    # Reference (plain JAX) forward semantics.
    h_ref = jnp.maximum(z @ w.T + b_enc, 0.0)
    zhat_ref = h_ref @ w + b_dec
    assert h.shape == h_ref.shape and z_hat.shape == zhat_ref.shape
    assert jnp.allclose(h, h_ref, atol=5e-4, rtol=5e-4)
    assert jnp.allclose(z_hat, zhat_ref, atol=5e-4, rtol=5e-4)
    return z, h, z_hat


if __name__ == "__main__":
    beta_l1, beta_norm = 1e-3, 1e-2
    key = jax.random.PRNGKey(0)
    k1, k2 = jax.random.split(key)

    # Case 1: small demo shapes (single tile).
    z, h, z_hat = _check_case(k1, B=8, input_dim=128, hidden_dim=256)

    # Case 2: exercises batch padding (B not a multiple of the tile) and a
    # non-power-of-two hidden dim (tile_h picked as a divisor of 1280 -> no
    # padded weight rows).
    _check_case(k2, B=20, input_dim=256, hidden_dim=1280)

    # Exercise the loss path too (plain JAX glue).
    total, recon, sparse, norm = sparse_ae_loss(z, h, z_hat, beta_l1, beta_norm)
    jax.block_until_ready(total)

    print("KERNEL_OK")
</pallas_src>

<mosaic_0001>
module attributes {stable_mosaic.version = 11 : i64} {
  func.func @_sae_kernel(%arg0: i32, %arg1: i32, %arg2: memref<8x128xf32, #tpu.memory_space<vmem>>, %arg3: memref<256x128xf32, #tpu.memory_space<vmem>>, %arg4: memref<1x256xf32, #tpu.memory_space<vmem>>, %arg5: memref<1x128xf32, #tpu.memory_space<vmem>>, %arg6: memref<8x256xf32, #tpu.memory_space<vmem>>, %arg7: memref<8x128xf32, #tpu.memory_space<vmem>>) attributes {dimension_semantics = [#tpu.dimension_semantics<parallel>, #tpu.dimension_semantics<arbitrary>], iteration_bounds = array<i64: 1, 1>, scalar_prefetch = 0 : i64, scratch_operands = 0 : i64, tpu.core_type = #tpu.core_type<tc>, window_params = [{transform_indices = @transform_0, window_bounds = array<i64: 8, 128>}, {transform_indices = @transform_1, window_bounds = array<i64: 256, 128>}, {transform_indices = @transform_2, window_bounds = array<i64: 1, 256>}, {pipeline_mode = #tpu.pipeline_mode<synchronous>, transform_indices = @transform_3, window_bounds = array<i64: 1, 128>}, {transform_indices = @transform_4, window_bounds = array<i64: 8, 256>}, {transform_indices = @transform_5, window_bounds = array<i64: 8, 128>}]} {
    %c0 = arith.constant 0 : index
    %c0_0 = arith.constant 0 : index
    %0 = vector.load %arg2[%c0, %c0_0] : memref<8x128xf32, #tpu.memory_space<vmem>>, vector<8x128xf32>
    %c0_1 = arith.constant 0 : index
    %c0_2 = arith.constant 0 : index
    %1 = vector.load %arg3[%c0_1, %c0_2] : memref<256x128xf32, #tpu.memory_space<vmem>>, vector<256x128xf32>
    %cst = arith.constant dense<0.000000e+00> : vector<8x256xf32>
    %2 = tpu.matmul %0, %1, %cst {dimension_numbers = #tpu.dot_dimension_numbers<[1], [1], [0], [0], [0, 0, 1, 0], [], []>} : vector<8x128xf32>, vector<256x128xf32>, vector<8x256xf32> -> vector<8x256xf32>
    %c0_3 = arith.constant 0 : index
    %c0_4 = arith.constant 0 : index
    %3 = vector.load %arg4[%c0_3, %c0_4] : memref<1x256xf32, #tpu.memory_space<vmem>>, vector<1x256xf32>
    %4 = vector.broadcast %3 : vector<1x256xf32> to vector<8x256xf32>
    %5 = arith.addf %2, %4 : vector<8x256xf32>
    %cst_5 = arith.constant 0.000000e+00 : f32
    %6 = vector.broadcast %cst_5 : f32 to vector<8x256xf32>
    %7 = arith.maximumf %5, %6 : vector<8x256xf32>
    %c0_6 = arith.constant 0 : index
    %c0_7 = arith.constant 0 : index
    %8 = vector.load %arg6[%c0_6, %c0_7] : memref<8x256xf32, #tpu.memory_space<vmem>>, vector<8x256xf32>
    tpu.vector_store %arg6[%c0_6, %c0_7], %7 {strides = array<i32>} : memref<8x256xf32, #tpu.memory_space<vmem>>, vector<8x256xf32>,
    %cst_8 = arith.constant dense<0.000000e+00> : vector<8x128xf32>
    %9 = tpu.matmul %7, %1, %cst_8 {dimension_numbers = #tpu.dot_dimension_numbers<[1], [0], [0], [1], [0, 0, 1, 1], [], []>} : vector<8x256xf32>, vector<256x128xf32>, vector<8x128xf32> -> vector<8x128xf32>
    %c0_i32 = arith.constant 0 : i32
    %10 = arith.cmpi eq, %arg1, %c0_i32 : i32
    %11 = arith.extui %10 : i1 to i32
    %c0_i32_9 = arith.constant 0 : i32
    %12 = arith.cmpi ne, %11, %c0_i32_9 : i32
    scf.if %12 {
      %c0_12 = arith.constant 0 : index
      %c0_13 = arith.constant 0 : index
      %16 = vector.load %arg5[%c0_12, %c0_13] : memref<1x128xf32, #tpu.memory_space<vmem>>, vector<1x128xf32>
      %17 = vector.broadcast %16 : vector<1x128xf32> to vector<8x128xf32>
      %18 = arith.addf %9, %17 : vector<8x128xf32>
      %c0_14 = arith.constant 0 : index
      %c0_15 = arith.constant 0 : index
      %19 = vector.load %arg7[%c0_14, %c0_15] : memref<8x128xf32, #tpu.memory_space<vmem>>, vector<8x128xf32>
      tpu.vector_store %arg7[%c0_14, %c0_15], %18 {strides = array<i32>} : memref<8x128xf32, #tpu.memory_space<vmem>>, vector<8x128xf32>,
    } else {
    }
    %c0_i32_10 = arith.constant 0 : i32
    %13 = arith.cmpi ne, %arg1, %c0_i32_10 : i32
    %14 = arith.extui %13 : i1 to i32
    %c0_i32_11 = arith.constant 0 : i32
    %15 = arith.cmpi ne, %14, %c0_i32_11 : i32
    scf.if %15 {
      %c0_12 = arith.constant 0 : index
      %c0_13 = arith.constant 0 : index
      %16 = vector.load %arg7[%c0_12, %c0_13] : memref<8x128xf32, #tpu.memory_space<vmem>>, vector<8x128xf32>
      %17 = arith.addf %16, %9 : vector<8x128xf32>
      %c0_14 = arith.constant 0 : index
      %c0_15 = arith.constant 0 : index
      %18 = vector.load %arg7[%c0_14, %c0_15] : memref<8x128xf32, #tpu.memory_space<vmem>>, vector<8x128xf32>
      tpu.vector_store %arg7[%c0_14, %c0_15], %17 {strides = array<i32>} : memref<8x128xf32, #tpu.memory_space<vmem>>, vector<8x128xf32>,
    } else {
    }
    return
  }
  func.func @transform_0(%arg0: i32, %arg1: i32) -> (i32, i32) {
    %c0_i32 = arith.constant 0 : i32
    %c0_i32_0 = arith.constant 0 : i32
    return %arg0, %c0_i32 : i32, i32
  }
  func.func @transform_1(%arg0: i32, %arg1: i32) -> (i32, i32) {
    %c0_i32 = arith.constant 0 : i32
    %c0_i32_0 = arith.constant 0 : i32
    return %arg1, %c0_i32 : i32, i32
  }
  func.func @transform_2(%arg0: i32, %arg1: i32) -> (i32, i32) {
    %c0_i32 = arith.constant 0 : i32
    %c0_i32_0 = arith.constant 0 : i32
    return %c0_i32, %arg1 : i32, i32
  }
  func.func @transform_3(%arg0: i32, %arg1: i32) -> (i32, i32) {
    %c0_i32 = arith.constant 0 : i32
    %c0_i32_0 = arith.constant 0 : i32
    %c0_i32_1 = arith.constant 0 : i32
    return %c0_i32, %c0_i32_0 : i32, i32
  }
  func.func @transform_4(%arg0: i32, %arg1: i32) -> (i32, i32) {
    %c0_i32 = arith.constant 0 : i32
    return %arg0, %arg1 : i32, i32
  }
  func.func @transform_5(%arg0: i32, %arg1: i32) -> (i32, i32) {
    %c0_i32 = arith.constant 0 : i32
    %c0_i32_0 = arith.constant 0 : i32
    return %arg0, %c0_i32 : i32, i32
  }
}

</mosaic_0001>

<llo_original>
// kernel: sparse_ae_forward.1
$region0: #{sparse_ae_forward.1}
  #allocation0 [shape = 'u32[]', space=smem, size = 0x4, offset = 0x4, fixed_abs, tag = 'smem constant byte address 0x4 - core index']
  #allocation1 [shape = 'u32[72,128]{1,0:T(1,128)}', space=vmem, size = 0x9000, scoped, tag = 'internal scratch']
  %s0 = inlined_call_operand.hbm [shape: f32[8,128], index: 0, kind: input, shape index: {}]
  %s1 = inlined_call_operand.hbm [shape: f32[256,128], index: 1, kind: input, shape index: {}]
  %s2 = inlined_call_operand.vmem [shape: f32[1,256], index: 2, kind: input, shape index: {}]
  %s3 = inlined_call_operand.vmem [shape: f32[1,128], index: 3, kind: input, shape index: {}]
  %s4 = inlined_call_operand.hbm [shape: f32[8,256], index: 4, kind: output, shape index: {0}]
  %s5 = inlined_call_operand.hbm [shape: f32[8,128], index: 5, kind: output, shape index: {1}]
  %6 = xla_tuple %s4, %s5
  %s7 = sld [smem:[#allocation0]]
  $region50: #{sparse_ae_forward.1} parent=0
    _
  %s9 = ssub.s32 1, %s7
  %s10 = scalar_select 0, %s9, %s7
  $region1: #{sparse_ae_forward.1} parent=0
    #allocation2 [shape = 'u8[4096]{0}', space=vmem, size = 0x1000, scoped, tag = 'input window, operand 0, single buffered']
    #allocation3 [shape = 's32[1]{0}', space=sflag, size = 0x4, scoped, tag = 'scoped memory for sparse_ae_forward.1']
    #allocation4 [shape = 's32[1]{0}', space=sflag, size = 0x4, scoped, tag = 'scoped memory for sparse_ae_forward.1']
    #allocation5 [shape = 'u8[131072]{0}', space=vmem, size = 0x20000, scoped, tag = 'input window, operand 1, single buffered']
    #allocation6 [shape = 's32[1]{0}', space=sflag, size = 0x4, scoped, tag = 'scoped memory for sparse_ae_forward.1']
    #allocation7 [shape = 'u8[8192]{0}', space=vmem, size = 0x2000, scoped, tag = 'output window, operand 0, single buffered']
    #allocation8 [shape = 'u8[4096]{0}', space=vmem, size = 0x1000, scoped, tag = 'output window, operand 1, single buffered']
    #allocation9 [shape = 's32[1]{0}', space=sflag, size = 0x4, scoped, tag = 'scoped memory for sparse_ae_forward.1']
    %11 = vsyncpa [#allocation3], 0
    %12 = vsyncpa [#allocation6], 0
    %13 = vsyncpa [#allocation4], 0
    %14 = vsyncpa [#allocation9], 0
    // Predicated region
    $region2: #{sparse_ae_forward.1} parent=1 // pred_check
      _
    $region3: #{sparse_ae_forward.1} parent=1 // pred_check_branch
      %16 = sbr.rel (0) target = $region5
    $region4: #{sparse_ae_forward.1} parent=1 // pred_region
      %18 = vsyncadd [#allocation3], 0
      %s20 = sshll.u32 %s0, 4
      %s21 = int_to_ptr.hbm [resolvable:$true] %s20
      %s22 = sshll.u32 [#allocation2], 4
      %s23 = int_to_ptr.vmem [resolvable:$true] %s22
      %25 = dma.hbm_to_vmem [thread:$0]  %s21, 128, %s23, [#allocation3]
    $region5: #{sparse_ae_forward.1} parent=1 // pred_fallthru
      _
    // Predicated region
    $region6: #{sparse_ae_forward.1} parent=1 // pred_check
      _
    $region7: #{sparse_ae_forward.1} parent=1 // pred_check_branch
      %27 = sbr.rel (0) target = $region9
    $region8: #{sparse_ae_forward.1} parent=1 // pred_region
      %29 = vsyncadd [#allocation6], 0
      %s30 = sshll.u32 %s1, 4
      %s31 = int_to_ptr.hbm [resolvable:$true] %s30
      %s32 = sshll.u32 [#allocation5], 4
      %s33 = int_to_ptr.vmem [resolvable:$true] %s32
      %38 = dma.hbm_to_vmem [thread:$0]  %s31, 4096, %s33, [#allocation6], 128, 128, 8
    $region9: #{sparse_ae_forward.1} parent=1 // pred_fallthru
      _
    // Predicated region
    $region10: #{sparse_ae_forward.1} parent=1 // pred_check
      _
    $region11: #{sparse_ae_forward.1} parent=1 // pred_check_branch
      %40 = sbr.rel (0) target = $region13
    $region12: #{sparse_ae_forward.1} parent=1 // pred_region
      _
    $region13: #{sparse_ae_forward.1} parent=1 // pred_fallthru
      _
    // Predicated region
    $region14: #{sparse_ae_forward.1} parent=1 // pred_check
      _
    $region15: #{sparse_ae_forward.1} parent=1 // pred_check_branch
      %42 = sbr.rel (0) target = $region17
    $region16: #{sparse_ae_forward.1} parent=1 // pred_region
      _
    $region17: #{sparse_ae_forward.1} parent=1 // pred_fallthru
      _
    // Predicated region
    $region18: #{sparse_ae_forward.1} parent=1 // pred_check
      _
    $region19: #{sparse_ae_forward.1} parent=1 // pred_check_branch
      %44 = sbr.rel (0) target = $region21
    $region20: #{sparse_ae_forward.1} parent=1 // pred_region
      %46 = dma.done [#allocation3], 128
    $region21: #{sparse_ae_forward.1} parent=1 // pred_fallthru
      _
    // Predicated region
    $region22: #{sparse_ae_forward.1} parent=1 // pred_check
      _
    $region23: #{sparse_ae_forward.1} parent=1 // pred_check_branch
      %48 = sbr.rel (0) target = $region25
    $region24: #{sparse_ae_forward.1} parent=1 // pred_region
      %50 = dma.done [#allocation6], 4096
    $region25: #{sparse_ae_forward.1} parent=1 // pred_fallthru
      _
    %v51 = vld [vmem:[#allocation2] sm:$0xff]
    %v52 = vld [vmem:[#allocation5] sm:$0xff]
    %v53 = vld [vmem:[#allocation5 + $0x8] sm:$0xff]
    %v54 = vld [vmem:[#allocation5 + $0x10] sm:$0xff]
    %v55 = vld [vmem:[#allocation5 + $0x18] sm:$0xff]
    %v56 = vld [vmem:[#allocation5 + $0x20] sm:$0xff]
    %v57 = vld [vmem:[#allocation5 + $0x28] sm:$0xff]
    %v58 = vld [vmem:[#allocation5 + $0x30] sm:$0xff]
    %v59 = vld [vmem:[#allocation5 + $0x38] sm:$0xff]
    %v60 = vld [vmem:[#allocation5 + $0x40] sm:$0xff]
    %v61 = vld [vmem:[#allocation5 + $0x48] sm:$0xff]
    %v62 = vld [vmem:[#allocation5 + $0x50] sm:$0xff]
    %v63 = vld [vmem:[#allocation5 + $0x58] sm:$0xff]
    %v64 = vld [vmem:[#allocation5 + $0x60] sm:$0xff]
    %v65 = vld [vmem:[#allocation5 + $0x68] sm:$0xff]
    %v66 = vld [vmem:[#allocation5 + $0x70] sm:$0xff]
    %v67 = vld [vmem:[#allocation5 + $0x78] sm:$0xff]
    %v68 = vld [vmem:[#allocation5 + $0x80] sm:$0xff]
    %v69 = vld [vmem:[#allocation5 + $0x88] sm:$0xff]
    %v70 = vld [vmem:[#allocation5 + $0x90] sm:$0xff]
    %v71 = vld [vmem:[#allocation5 + $0x98] sm:$0xff]
    %v72 = vld [vmem:[#allocation5 + $0xa0] sm:$0xff]
    %v73 = vld [vmem:[#allocation5 + $0xa8] sm:$0xff]
    %v74 = vld [vmem:[#allocation5 + $0xb0] sm:$0xff]
    %v75 = vld [vmem:[#allocation5 + $0xb8] sm:$0xff]
    %v76 = vld [vmem:[#allocation5 + $0xc0] sm:$0xff]
    %v77 = vld [vmem:[#allocation5 + $0xc8] sm:$0xff]
    %v78 = vld [vmem:[#allocation5 + $0xd0] sm:$0xff]
    %v79 = vld [vmem:[#allocation5 + $0xd8] sm:$0xff]
    %v80 = vld [vmem:[#allocation5 + $0xe0] sm:$0xff]
    %v81 = vld [vmem:[#allocation5 + $0xe8] sm:$0xff]
    %v82 = vld [vmem:[#allocation5 + $0xf0] sm:$0xff]
    %v83 = vld [vmem:[#allocation5 + $0xf8] sm:$0xff]
    %v84 = vld [vmem:[%s2] sm:$0x3]
    %v86 = vperm.slane %v84, 0
    %v87 = vperm.slane %v84, 1
    %90 = vmatpush.xpose.msra.mxu0 %v67
    %91 = vmatpush.xpose.msra.mxu0 %v66
    %92 = vmatpush.xpose.msra.mxu0 %v65
    %93 = vmatpush.xpose.msra.mxu0 %v64
    %94 = vmatpush.xpose.msra.mxu0 %v63
    %95 = vmatpush.xpose.msra.mxu0 %v62
    %96 = vmatpush.xpose.msra.mxu0 %v61
    %97 = vmatpush.xpose.msra.mxu0 %v60
    %98 = vmatpush.xpose.msra.mxu0 %v59
    %99 = vmatpush.xpose.msra.mxu0 %v58
    %100 = vmatpush.xpose.msra.mxu0 %v57
    %101 = vmatpush.xpose.msra.mxu0 %v56
    %102 = vmatpush.xpose.msra.mxu0 %v55
    %103 = vmatpush.xpose.msra.mxu0 %v54
    %104 = vmatpush.xpose.msra.mxu0 %v53
    %105 = vmatpush.xpose.msra.mxu0 %v52
    %106 = vmatmul.f32.gmra.mxu0 %v51
    %v107 = vpop.f32.mrf.mxu0
    %v108 = vadd.f32 %v86, %v107
    %109 = vdwg.mxu0
    %110 = vmatpush.xpose.msra.mxu0 %v83
    %111 = vmatpush.xpose.msra.mxu0 %v82
    %112 = vmatpush.xpose.msra.mxu0 %v81
    %113 = vmatpush.xpose.msra.mxu0 %v80
    %114 = vmatpush.xpose.msra.mxu0 %v79
    %115 = vmatpush.xpose.msra.mxu0 %v78
    %116 = vmatpush.xpose.msra.mxu0 %v77
    %117 = vmatpush.xpose.msra.mxu0 %v76
    %118 = vmatpush.xpose.msra.mxu0 %v75
    %119 = vmatpush.xpose.msra.mxu0 %v74
    %120 = vmatpush.xpose.msra.mxu0 %v73
    %121 = vmatpush.xpose.msra.mxu0 %v72
    %122 = vmatpush.xpose.msra.mxu0 %v71
    %123 = vmatpush.xpose.msra.mxu0 %v70
    %124 = vmatpush.xpose.msra.mxu0 %v69
    %125 = vmatpush.xpose.msra.mxu0 %v68
    %126 = vmatmul.f32.gmra.mxu0 %v51
    %v127 = vpop.f32.mrf.mxu0
    %v128 = vadd.f32 %v87, %v127
    %129 = vdwg.mxu0
    %v130 = vmax.f32 %v108, 0.0
    %v131 = vmax.f32 %v128, 0.0
    %132 = vst [vmem:[#allocation7] sm:$0xff] %v130
    %133 = vst [vmem:[#allocation7 + $0x8] sm:$0xff] %v131
    %134 = vmatpush.msra.mxu0 %v67
    %135 = vmatpush.msra.mxu0 %v66
    %136 = vmatpush.msra.mxu0 %v65
    %137 = vmatpush.msra.mxu0 %v64
    %138 = vmatpush.msra.mxu0 %v63
    %139 = vmatpush.msra.mxu0 %v62
    %140 = vmatpush.msra.mxu0 %v61
    %141 = vmatpush.msra.mxu0 %v60
    %142 = vmatpush.msra.mxu0 %v59
    %143 = vmatpush.msra.mxu0 %v58
    %144 = vmatpush.msra.mxu0 %v57
    %145 = vmatpush.msra.mxu0 %v56
    %146 = vmatpush.msra.mxu0 %v55
    %147 = vmatpush.msra.mxu0 %v54
    %148 = vmatpush.msra.mxu0 %v53
    %149 = vmatpush.msra.mxu0 %v52
    %150 = vmatmul.f32.gmra.mxu0 %v130
    %v151 = vpop.f32.mrf.mxu0
    %v152 = vadd.f32 0.0, %v151
    %153 = vdwg.mxu0
    %154 = vmatpush.msra.mxu0 %v83
    %155 = vmatpush.msra.mxu0 %v82
    %156 = vmatpush.msra.mxu0 %v81
    %157 = vmatpush.msra.mxu0 %v80
    %158 = vmatpush.msra.mxu0 %v79
    %159 = vmatpush.msra.mxu0 %v78
    %160 = vmatpush.msra.mxu0 %v77
    %161 = vmatpush.msra.mxu0 %v76
    %162 = vmatpush.msra.mxu0 %v75
    %163 = vmatpush.msra.mxu0 %v74
    %164 = vmatpush.msra.mxu0 %v73
    %165 = vmatpush.msra.mxu0 %v72
    %166 = vmatpush.msra.mxu0 %v71
    %167 = vmatpush.msra.mxu0 %v70
    %168 = vmatpush.msra.mxu0 %v69
    %169 = vmatpush.msra.mxu0 %v68
    %170 = vmatmul.f32.gmra.mxu0 %v131
    %v171 = vpop.f32.mrf.mxu0
    %v172 = vadd.f32 %v152, %v171
    %173 = vdwg.mxu0
    %p174 = scmp.eq.s32.totalorder 0, 0
    // Predicated region
    $region26: #{sparse_ae_forward.1} parent=1 // pred_check
      %p175 = pneg %p174
    $region27: #{sparse_ae_forward.1} parent=1 // pred_check_branch
      %177 = sbr.rel (%p175) target = $region29
    $region28: #{sparse_ae_forward.1} parent=1 // pred_region
      %v178 = vld [vmem:[%s3] sm:$0x1]
      %v180 = vperm.slane %v178, 0
      %v182 = vadd.f32 %v172, %v180
      %183 = vst [vmem:[#allocation8] sm:$0xff] %v182
    $region29: #{sparse_ae_forward.1} parent=1 // pred_fallthru
      _
    %p184 = scmp.ne.s32.totalorder 0, 0
    // Predicated region
    $region30: #{sparse_ae_forward.1} parent=1 // pred_check
      %p185 = pneg %p184
    $region31: #{sparse_ae_forward.1} parent=1 // pred_check_branch
      %187 = sbr.rel (%p185) target = $region33
    $region32: #{sparse_ae_forward.1} parent=1 // pred_region
      %v188 = vld [vmem:[#allocation8] sm:$0xff]
      %v189 = vadd.f32 %v188, %v172
      %190 = vst [vmem:[#allocation8] sm:$0xff] %v189
    $region33: #{sparse_ae_forward.1} parent=1 // pred_fallthru
      _
    // Predicated region
    $region34: #{sparse_ae_forward.1} parent=1 // pred_check
      _
    $region35: #{sparse_ae_forward.1} parent=1 // pred_check_branch
      %192 = sbr.rel (0) target = $region37
    $region36: #{sparse_ae_forward.1} parent=1 // pred_region
      %194 = vsyncadd [#allocation4], 0
      %s196 = sshll.u32 [#allocation7], 4
      %s197 = int_to_ptr.vmem [resolvable:$true] %s196
      %s198 = sshll.u32 %s4, 4
      %s199 = int_to_ptr.hbm [resolvable:$true] %s198
      %201 = dma.vmem_to_hbm [thread:$0]  %s197, 256, %s199, [#allocation4]
    $region37: #{sparse_ae_forward.1} parent=1 // pred_fallthru
      _
    // Predicated region
    $region38: #{sparse_ae_forward.1} parent=1 // pred_check
      _
    $region39: #{sparse_ae_forward.1} parent=1 // pred_check_branch
      %203 = sbr.rel (0) target = $region41
    $region40: #{sparse_ae_forward.1} parent=1 // pred_region
      %205 = vsyncadd [#allocation9], 0
      %s207 = sshll.u32 [#allocation8], 4
      %s208 = int_to_ptr.vmem [resolvable:$true] %s207
      %s209 = sshll.u32 %s5, 4
      %s210 = int_to_ptr.hbm [resolvable:$true] %s209
      %212 = dma.vmem_to_hbm [thread:$0]  %s208, 128, %s210, [#allocation9]
    $region41: #{sparse_ae_forward.1} parent=1 // pred_fallthru
      _
    // Predicated region
    $region42: #{sparse_ae_forward.1} parent=1 // pred_check
      _
    $region43: #{sparse_ae_forward.1} parent=1 // pred_check_branch
      %214 = sbr.rel (0) target = $region45
    $region44: #{sparse_ae_forward.1} parent=1 // pred_region
      %216 = dma.done [#allocation4], 256
    $region45: #{sparse_ae_forward.1} parent=1 // pred_fallthru
      _
    // Predicated region
    $region46: #{sparse_ae_forward.1} parent=1 // pred_check
      _
    $region47: #{sparse_ae_forward.1} parent=1 // pred_check_branch
      %218 = sbr.rel (0) target = $region49
    $region48: #{sparse_ae_forward.1} parent=1 // pred_region
      %220 = dma.done [#allocation9], 128
    $region49: #{sparse_ae_forward.1} parent=1 // pred_fallthru
      _
    %221 = vsyncpa [#allocation3], 1
    %222 = vsyncpa [#allocation6], 1
    %223 = vsyncpa [#allocation4], 1
    %224 = vsyncpa [#allocation9], 1

</llo_original>
